<compile_context>
chip_gen: v7x
topology: tpu7x:2x2x1
jax: 0.10.0
libtpu: 0.0.40
codegen_flags: <defaults>
</compile_context>

<pallas_src>
import functools

import jax
import jax.numpy as jnp
from jax.experimental import pallas as pl
from jax.experimental.pallas import tpu as pltpu

EPS = 1e-5


def _round_up(a, b):
    return -(-a // b) * b


def _resblock_kernel(x_ref, mp_ref, mn_ref, w1_ref, b1_ref, w2_ref, b2_ref,
                     sw_ref, sb_ref, se2_ref, out_ref, *, md):
    # x_ref : (C, W)      packed activations (channels on sublanes, batch*len on lanes)
    # mp/mn : (1, W)      1.0 where position has a left / right in-sequence neighbour
    # w1/w2 : (3, C, C)   per-tap conv weights, BN scale pre-folded
    # b1/b2 : (C, 1)      folded BN bias
    # sw    : (3, Crp, C) sew1 folded through conv_upper, per tap (Cr padded to 8)
    # sb    : (Crp, 1)    sew1 @ b2
    # se2   : (2C, Crp)   SE second 1x1 weights (K padded to 8)
    # out   : (C, W)      pad columns hold garbage (sliced off in the wrapper)
    C, W = out_ref.shape

    xin = x_ref[...]
    mp = mp_ref[...]
    mn = mn_ref[...]

    def taps(a):
        # (a[j-1], a[j], a[j+1]); cross-sequence-boundary taps are zeroed by the
        # period-L lane masks.  Rolls run on the XLU, which is idle in this
        # kernel, instead of relayout copies from +/-1 lane slices.
        am = pltpu.roll(a, shift=1, axis=1) * mp
        ap = pltpu.roll(a, shift=W - 1, axis=1) * mn
        return (am.astype(md), a.astype(md), ap.astype(md))

    def dot3(w_ref, t):
        acc = jnp.dot(w_ref[0], t[0], preferred_element_type=jnp.float32)
        acc = acc + jnp.dot(w_ref[1], t[1], preferred_element_type=jnp.float32)
        acc = acc + jnp.dot(w_ref[2], t[2], preferred_element_type=jnp.float32)
        return acc

    # ---- conv_lower: Conv1d(C, C, 3, padding=1) + BN + ReLU -----------------
    h = jnp.maximum(dot3(w1_ref, taps(xin)) + b1_ref[...], 0.0)          # (C, W)

    # ---- conv_upper (p) and SE first 1x1 (z) both issue from the h taps -----
    th = taps(h)
    p = dot3(w2_ref, th) + b2_ref[...]                                   # (C, W)
    z = jnp.maximum(dot3(sw_ref, th) + sb_ref[...], 0.0)                 # (Crp, W)

    # ---- SE second 1x1 on the MXU (K = Crp) ---------------------------------
    wb = jnp.dot(se2_ref[...], z.astype(md), preferred_element_type=jnp.float32)
    gate = jax.nn.sigmoid(wb[:C, :])
    shift = wb[C:, :]

    # ---- residual add + final ReLU ------------------------------------------
    out_ref[...] = jnp.maximum(xin + p * gate + shift, 0.0)


def _fold_bn(gamma, beta, mean, var):
    scale = gamma / jnp.sqrt(var + EPS)
    return scale, beta - mean * scale


def _fuse_conv_bn(w, scale):
    # torch layout (Cout, Cin, 3) -> per-tap (3, Cout, Cin), BN scale folded in.
    return jnp.transpose(w * scale[:, None, None], (2, 0, 1))


def _plan(N, L):
    # ~2048 valid lanes per grid step (amortizes the ~0.35us/step overhead and
    # per-step MXU weight push/drain).  At these channel counts a step's blocks
    # are a few hundred KB — far below the VMEM limit on v5e/v6e/v7x.
    Nb = min(N, max(1, 2048 // L))
    G = -(-N // Nb)
    # v7x has 2 TensorCores: prefer an even 'parallel' grid when splitting still
    # leaves every step lane-dense (>= 128 valid lanes).
    if G % 2 == 1:
        for nb in range(Nb, 0, -1):
            g = -(-N // nb)
            if g % 2 == 0 and nb * L >= 128:
                Nb, G = nb, g
                break
    Wout = _round_up(Nb * L, 128)
    return Nb, G, Wout


def resblock_forward(x, params, *, matmul_dtype=jnp.float32):
    N, C, L = x.shape
    Nb, G, Wout = _plan(N, L)
    Npad = G * Nb

    s1, b1 = _fold_bn(*params["bn1"])
    s2, b2 = _fold_bn(*params["bn2"])
    w1 = _fuse_conv_bn(params["w1"].astype(jnp.float32), s1)          # (3, C, C)
    w2 = _fuse_conv_bn(params["w2"].astype(jnp.float32), s2)          # (3, C, C)
    b1 = b1.reshape(C, 1).astype(jnp.float32)
    b2 = b2.reshape(C, 1).astype(jnp.float32)

    sew1 = params["sew1"].astype(jnp.float32)                         # (Cr, C)
    sew2 = params["sew2"].astype(jnp.float32)                         # (2C, Cr)
    Cr = sew1.shape[0]
    Crp = _round_up(max(Cr, 8), 8)

    # Fold sew1 through conv_upper: z = relu(sum_k (sew1 @ W2_k) @ h_k + sew1 @ b2).
    sw = jnp.einsum("ro,koi->kri", sew1, w2)                          # (3, Cr, C)
    sb = sew1 @ b2                                                    # (Cr, 1)
    sw = jnp.pad(sw, ((0, 0), (0, Crp - Cr), (0, 0)))
    sb = jnp.pad(sb, ((0, Crp - Cr), (0, 0)))
    se2 = jnp.pad(sew2, ((0, 0), (0, Crp - Cr)))                      # (2C, Crp)

    md = matmul_dtype
    w1 = w1.astype(md)
    w2 = w2.astype(md)
    sw = sw.astype(md)
    se2 = se2.astype(md)

    # Lane-dense packed layout, no halo: (C, G*Wout).  Each group holds Nb
    # consecutive batch elements' sequences back-to-back plus zero pad lanes.
    # Single transpose + pad; no scatter repack.
    xf = x.astype(jnp.float32)
    if Npad != N:
        xf = jnp.pad(xf, ((0, Npad - N), (0, 0), (0, 0)))
    xin = jnp.transpose(xf, (1, 0, 2)).reshape(C, G, Nb * L)
    if Wout != Nb * L:
        xin = jnp.pad(xin, ((0, 0), (0, 0), (0, Wout - Nb * L)))
    xin = xin.reshape(C, G * Wout)

    # Period-L sequence-boundary masks, shared by every grid step (constant
    # index_map) — replaces per-step iota / %L / where chains in the kernel.
    col = jnp.arange(Wout, dtype=jnp.int32)
    mp = ((col % L) != 0).astype(jnp.float32).reshape(1, Wout)
    mn = ((col % L) != (L - 1)).astype(jnp.float32).reshape(1, Wout)

    grid_spec = pltpu.PrefetchScalarGridSpec(
        num_scalar_prefetch=0,
        grid=(G,),
        in_specs=[
            pl.BlockSpec((C, Wout), lambda g: (0, g)),
            pl.BlockSpec((1, Wout), lambda g: (0, 0)),
            pl.BlockSpec((1, Wout), lambda g: (0, 0)),
            pl.BlockSpec((3, C, C), lambda g: (0, 0, 0)),
            pl.BlockSpec((C, 1), lambda g: (0, 0)),
            pl.BlockSpec((3, C, C), lambda g: (0, 0, 0)),
            pl.BlockSpec((C, 1), lambda g: (0, 0)),
            pl.BlockSpec((3, Crp, C), lambda g: (0, 0, 0)),
            pl.BlockSpec((Crp, 1), lambda g: (0, 0)),
            pl.BlockSpec((2 * C, Crp), lambda g: (0, 0)),
        ],
        out_specs=pl.BlockSpec((C, Wout), lambda g: (0, g)),
    )

    out_packed = pl.pallas_call(
        functools.partial(_resblock_kernel, md=md),
        out_shape=jax.ShapeDtypeStruct((C, G * Wout), jnp.float32),
        grid_spec=grid_spec,
        compiler_params=pltpu.CompilerParams(
            # grid steps are independent -> both TensorCores get work on v7x
            dimension_semantics=("parallel",)),
    )(xin, mp, mn, w1, b1, w2, b2, sw, sb, se2)

    out = out_packed.reshape(C, G, Wout)[:, :, :Nb * L].reshape(C, Npad, L)
    return jnp.transpose(out[:, :N, :], (1, 0, 2))


# ------------------------- pure-JAX reference -------------------------
def ref_forward(x, params):
    L = x.shape[-1]
    C = x.shape[1]

    def conv3(a, w):  # w: (Co, Ci, 3), padding=1
        ap = jnp.pad(a, ((0, 0), (0, 0), (1, 1)))
        return sum(jnp.einsum("oi,nil->nol", w[:, :, k], ap[:, :, k:k + L])
                   for k in range(3))

    def bn(a, g, b, m, v):
        return ((a - m[None, :, None]) / jnp.sqrt(v[None, :, None] + EPS)
                * g[None, :, None] + b[None, :, None])

    h = jax.nn.relu(bn(conv3(x, params["w1"]), *params["bn1"]))
    p = bn(conv3(h, params["w2"]), *params["bn2"])
    # The PyTorch SEBlock.forward overwrites the adaptive_avg_pool result, so
    # the 1x1 convs act on the full (C, L) map.
    z = jax.nn.relu(jnp.einsum("oi,nil->nol", params["sew1"], p))
    wb = jnp.einsum("oi,nil->nol", params["sew2"], z)
    gate = jax.nn.sigmoid(wb[:, :C])
    shift = wb[:, C:]
    return jax.nn.relu(x + p * gate + shift)


if __name__ == "__main__":
    N, C, L = 2, 32, 16          # channels=32 so channels // reduction(16) = 2
    Cr = C // 16

    ks = jax.random.split(jax.random.PRNGKey(0), 13)
    params = {
        "w1": 0.1 * jax.random.normal(ks[0], (C, C, 3), jnp.float32),
        "w2": 0.1 * jax.random.normal(ks[1], (C, C, 3), jnp.float32),
        "bn1": (jax.random.uniform(ks[2], (C,), jnp.float32, 0.5, 1.5),   # gamma
                0.1 * jax.random.normal(ks[3], (C,), jnp.float32),        # beta
                0.1 * jax.random.normal(ks[4], (C,), jnp.float32),        # running_mean
                jax.random.uniform(ks[5], (C,), jnp.float32, 0.5, 1.5)),  # running_var
        "bn2": (jax.random.uniform(ks[6], (C,), jnp.float32, 0.5, 1.5),
                0.1 * jax.random.normal(ks[7], (C,), jnp.float32),
                0.1 * jax.random.normal(ks[8], (C,), jnp.float32),
                jax.random.uniform(ks[9], (C,), jnp.float32, 0.5, 1.5)),
        "sew1": 0.1 * jax.random.normal(ks[10], (Cr, C), jnp.float32),
        "sew2": 0.1 * jax.random.normal(ks[11], (2 * C, Cr), jnp.float32),
    }
    x = jax.random.normal(ks[12], (N, C, L), jnp.float32)

    out = jax.block_until_ready(jax.jit(resblock_forward)(x, params))
    ref = jax.block_until_ready(ref_forward(x, params))

    assert out.shape == (N, C, L)
    assert jnp.allclose(out, ref, atol=1e-4, rtol=1e-4), "mismatch vs reference"
    print("KERNEL_OK")
</pallas_src>

<mosaic_0001>
module attributes {stable_mosaic.version = 11 : i64} {
  func.func @_resblock_kernel(%arg0: i32, %arg1: memref<32x128xf32, #tpu.memory_space<vmem>>, %arg2: memref<1x128xf32, #tpu.memory_space<vmem>>, %arg3: memref<1x128xf32, #tpu.memory_space<vmem>>, %arg4: memref<3x32x32xf32, #tpu.memory_space<vmem>>, %arg5: memref<32x1xf32, #tpu.memory_space<vmem>>, %arg6: memref<3x32x32xf32, #tpu.memory_space<vmem>>, %arg7: memref<32x1xf32, #tpu.memory_space<vmem>>, %arg8: memref<3x8x32xf32, #tpu.memory_space<vmem>>, %arg9: memref<8x1xf32, #tpu.memory_space<vmem>>, %arg10: memref<64x8xf32, #tpu.memory_space<vmem>>, %arg11: memref<32x128xf32, #tpu.memory_space<vmem>>) attributes {dimension_semantics = [#tpu.dimension_semantics<parallel>], iteration_bounds = array<i64: 1>, scalar_prefetch = 0 : i64, scratch_operands = 0 : i64, tpu.core_type = #tpu.core_type<tc>, window_params = [{transform_indices = @transform_0, window_bounds = array<i64: 32, 128>}, {pipeline_mode = #tpu.pipeline_mode<synchronous>, transform_indices = @transform_1, window_bounds = array<i64: 1, 128>}, {pipeline_mode = #tpu.pipeline_mode<synchronous>, transform_indices = @transform_2, window_bounds = array<i64: 1, 128>}, {pipeline_mode = #tpu.pipeline_mode<synchronous>, transform_indices = @transform_3, window_bounds = array<i64: 3, 32, 32>}, {pipeline_mode = #tpu.pipeline_mode<synchronous>, transform_indices = @transform_4, window_bounds = array<i64: 32, 1>}, {pipeline_mode = #tpu.pipeline_mode<synchronous>, transform_indices = @transform_5, window_bounds = array<i64: 3, 32, 32>}, {pipeline_mode = #tpu.pipeline_mode<synchronous>, transform_indices = @transform_6, window_bounds = array<i64: 32, 1>}, {pipeline_mode = #tpu.pipeline_mode<synchronous>, transform_indices = @transform_7, window_bounds = array<i64: 3, 8, 32>}, {pipeline_mode = #tpu.pipeline_mode<synchronous>, transform_indices = @transform_8, window_bounds = array<i64: 8, 1>}, {pipeline_mode = #tpu.pipeline_mode<synchronous>, transform_indices = @transform_9, window_bounds = array<i64: 64, 8>}, {transform_indices = @transform_10, window_bounds = array<i64: 32, 128>}]} {
    %c0 = arith.constant 0 : index
    %c0_0 = arith.constant 0 : index
    %0 = vector.load %arg1[%c0, %c0_0] : memref<32x128xf32, #tpu.memory_space<vmem>>, vector<32x128xf32>
    %c0_1 = arith.constant 0 : index
    %c0_2 = arith.constant 0 : index
    %1 = vector.load %arg2[%c0_1, %c0_2] : memref<1x128xf32, #tpu.memory_space<vmem>>, vector<1x128xf32>
    %c0_3 = arith.constant 0 : index
    %c0_4 = arith.constant 0 : index
    %2 = vector.load %arg3[%c0_3, %c0_4] : memref<1x128xf32, #tpu.memory_space<vmem>>, vector<1x128xf32>
    %c1_i32 = arith.constant 1 : i32
    %3 = tpu.dynamic_rotate %0 by %c1_i32 dim 1 : vector<32x128xf32>, i32 -> vector<32x128xf32>
    %4 = vector.broadcast %1 : vector<1x128xf32> to vector<32x128xf32>
    %5 = arith.mulf %3, %4 : vector<32x128xf32>
    %c127_i32 = arith.constant 127 : i32
    %6 = tpu.dynamic_rotate %0 by %c127_i32 dim 1 : vector<32x128xf32>, i32 -> vector<32x128xf32>
    %7 = vector.broadcast %2 : vector<1x128xf32> to vector<32x128xf32>
    %8 = arith.mulf %6, %7 : vector<32x128xf32>
    %c0_5 = arith.constant 0 : index
    %c0_6 = arith.constant 0 : index
    %c0_7 = arith.constant 0 : index
    %9 = vector.load %arg4[%c0_5, %c0_6, %c0_7] : memref<3x32x32xf32, #tpu.memory_space<vmem>>, vector<1x32x32xf32>
    %10 = vector.shape_cast %9 : vector<1x32x32xf32> to vector<32x32xf32>
    %cst = arith.constant dense<0.000000e+00> : vector<32x128xf32>
    %11 = tpu.matmul %10, %5, %cst {dimension_numbers = #tpu.dot_dimension_numbers<[1], [0], [0], [1], [0, 0, 1, 1], [], []>} : vector<32x32xf32>, vector<32x128xf32>, vector<32x128xf32> -> vector<32x128xf32>
    %c1 = arith.constant 1 : index
    %c0_8 = arith.constant 0 : index
    %c0_9 = arith.constant 0 : index
    %12 = vector.load %arg4[%c1, %c0_8, %c0_9] : memref<3x32x32xf32, #tpu.memory_space<vmem>>, vector<1x32x32xf32>
    %13 = vector.shape_cast %12 : vector<1x32x32xf32> to vector<32x32xf32>
    %cst_10 = arith.constant dense<0.000000e+00> : vector<32x128xf32>
    %14 = tpu.matmul %13, %0, %cst_10 {dimension_numbers = #tpu.dot_dimension_numbers<[1], [0], [0], [1], [0, 0, 1, 1], [], []>} : vector<32x32xf32>, vector<32x128xf32>, vector<32x128xf32> -> vector<32x128xf32>
    %15 = arith.addf %11, %14 : vector<32x128xf32>
    %c2 = arith.constant 2 : index
    %c0_11 = arith.constant 0 : index
    %c0_12 = arith.constant 0 : index
    %16 = vector.load %arg4[%c2, %c0_11, %c0_12] : memref<3x32x32xf32, #tpu.memory_space<vmem>>, vector<1x32x32xf32>
    %17 = vector.shape_cast %16 : vector<1x32x32xf32> to vector<32x32xf32>
    %cst_13 = arith.constant dense<0.000000e+00> : vector<32x128xf32>
    %18 = tpu.matmul %17, %8, %cst_13 {dimension_numbers = #tpu.dot_dimension_numbers<[1], [0], [0], [1], [0, 0, 1, 1], [], []>} : vector<32x32xf32>, vector<32x128xf32>, vector<32x128xf32> -> vector<32x128xf32>
    %19 = arith.addf %15, %18 : vector<32x128xf32>
    %c0_14 = arith.constant 0 : index
    %c0_15 = arith.constant 0 : index
    %20 = vector.load %arg5[%c0_14, %c0_15] : memref<32x1xf32, #tpu.memory_space<vmem>>, vector<32x1xf32>
    %21 = vector.broadcast %20 : vector<32x1xf32> to vector<32x128xf32>
    %22 = arith.addf %19, %21 : vector<32x128xf32>
    %cst_16 = arith.constant 0.000000e+00 : f32
    %23 = vector.broadcast %cst_16 : f32 to vector<32x128xf32>
    %24 = arith.maximumf %22, %23 : vector<32x128xf32>
    %c1_i32_17 = arith.constant 1 : i32
    %25 = tpu.dynamic_rotate %24 by %c1_i32_17 dim 1 : vector<32x128xf32>, i32 -> vector<32x128xf32>
    %26 = vector.broadcast %1 : vector<1x128xf32> to vector<32x128xf32>
    %27 = arith.mulf %25, %26 : vector<32x128xf32>
    %c127_i32_18 = arith.constant 127 : i32
    %28 = tpu.dynamic_rotate %24 by %c127_i32_18 dim 1 : vector<32x128xf32>, i32 -> vector<32x128xf32>
    %29 = vector.broadcast %2 : vector<1x128xf32> to vector<32x128xf32>
    %30 = arith.mulf %28, %29 : vector<32x128xf32>
    %c0_19 = arith.constant 0 : index
    %c0_20 = arith.constant 0 : index
    %c0_21 = arith.constant 0 : index
    %31 = vector.load %arg6[%c0_19, %c0_20, %c0_21] : memref<3x32x32xf32, #tpu.memory_space<vmem>>, vector<1x32x32xf32>
    %32 = vector.shape_cast %31 : vector<1x32x32xf32> to vector<32x32xf32>
    %cst_22 = arith.constant dense<0.000000e+00> : vector<32x128xf32>
    %33 = tpu.matmul %32, %27, %cst_22 {dimension_numbers = #tpu.dot_dimension_numbers<[1], [0], [0], [1], [0, 0, 1, 1], [], []>} : vector<32x32xf32>, vector<32x128xf32>, vector<32x128xf32> -> vector<32x128xf32>
    %c1_23 = arith.constant 1 : index
    %c0_24 = arith.constant 0 : index
    %c0_25 = arith.constant 0 : index
    %34 = vector.load %arg6[%c1_23, %c0_24, %c0_25] : memref<3x32x32xf32, #tpu.memory_space<vmem>>, vector<1x32x32xf32>
    %35 = vector.shape_cast %34 : vector<1x32x32xf32> to vector<32x32xf32>
    %cst_26 = arith.constant dense<0.000000e+00> : vector<32x128xf32>
    %36 = tpu.matmul %35, %24, %cst_26 {dimension_numbers = #tpu.dot_dimension_numbers<[1], [0], [0], [1], [0, 0, 1, 1], [], []>} : vector<32x32xf32>, vector<32x128xf32>, vector<32x128xf32> -> vector<32x128xf32>
    %37 = arith.addf %33, %36 : vector<32x128xf32>
    %c2_27 = arith.constant 2 : index
    %c0_28 = arith.constant 0 : index
    %c0_29 = arith.constant 0 : index
    %38 = vector.load %arg6[%c2_27, %c0_28, %c0_29] : memref<3x32x32xf32, #tpu.memory_space<vmem>>, vector<1x32x32xf32>
    %39 = vector.shape_cast %38 : vector<1x32x32xf32> to vector<32x32xf32>
    %cst_30 = arith.constant dense<0.000000e+00> : vector<32x128xf32>
    %40 = tpu.matmul %39, %30, %cst_30 {dimension_numbers = #tpu.dot_dimension_numbers<[1], [0], [0], [1], [0, 0, 1, 1], [], []>} : vector<32x32xf32>, vector<32x128xf32>, vector<32x128xf32> -> vector<32x128xf32>
    %41 = arith.addf %37, %40 : vector<32x128xf32>
    %c0_31 = arith.constant 0 : index
    %c0_32 = arith.constant 0 : index
    %42 = vector.load %arg7[%c0_31, %c0_32] : memref<32x1xf32, #tpu.memory_space<vmem>>, vector<32x1xf32>
    %43 = vector.broadcast %42 : vector<32x1xf32> to vector<32x128xf32>
    %44 = arith.addf %41, %43 : vector<32x128xf32>
    %c0_33 = arith.constant 0 : index
    %c0_34 = arith.constant 0 : index
    %c0_35 = arith.constant 0 : index
    %45 = vector.load %arg8[%c0_33, %c0_34, %c0_35] : memref<3x8x32xf32, #tpu.memory_space<vmem>>, vector<1x8x32xf32>
    %46 = vector.shape_cast %45 : vector<1x8x32xf32> to vector<8x32xf32>
    %cst_36 = arith.constant dense<0.000000e+00> : vector<8x128xf32>
    %47 = tpu.matmul %46, %27, %cst_36 {dimension_numbers = #tpu.dot_dimension_numbers<[1], [0], [0], [1], [0, 0, 1, 1], [], []>} : vector<8x32xf32>, vector<32x128xf32>, vector<8x128xf32> -> vector<8x128xf32>
    %c1_37 = arith.constant 1 : index
    %c0_38 = arith.constant 0 : index
    %c0_39 = arith.constant 0 : index
    %48 = vector.load %arg8[%c1_37, %c0_38, %c0_39] : memref<3x8x32xf32, #tpu.memory_space<vmem>>, vector<1x8x32xf32>
    %49 = vector.shape_cast %48 : vector<1x8x32xf32> to vector<8x32xf32>
    %cst_40 = arith.constant dense<0.000000e+00> : vector<8x128xf32>
    %50 = tpu.matmul %49, %24, %cst_40 {dimension_numbers = #tpu.dot_dimension_numbers<[1], [0], [0], [1], [0, 0, 1, 1], [], []>} : vector<8x32xf32>, vector<32x128xf32>, vector<8x128xf32> -> vector<8x128xf32>
    %51 = arith.addf %47, %50 : vector<8x128xf32>
    %c2_41 = arith.constant 2 : index
    %c0_42 = arith.constant 0 : index
    %c0_43 = arith.constant 0 : index
    %52 = vector.load %arg8[%c2_41, %c0_42, %c0_43] : memref<3x8x32xf32, #tpu.memory_space<vmem>>, vector<1x8x32xf32>
    %53 = vector.shape_cast %52 : vector<1x8x32xf32> to vector<8x32xf32>
    %cst_44 = arith.constant dense<0.000000e+00> : vector<8x128xf32>
    %54 = tpu.matmul %53, %30, %cst_44 {dimension_numbers = #tpu.dot_dimension_numbers<[1], [0], [0], [1], [0, 0, 1, 1], [], []>} : vector<8x32xf32>, vector<32x128xf32>, vector<8x128xf32> -> vector<8x128xf32>
    %55 = arith.addf %51, %54 : vector<8x128xf32>
    %c0_45 = arith.constant 0 : index
    %c0_46 = arith.constant 0 : index
    %56 = vector.load %arg9[%c0_45, %c0_46] : memref<8x1xf32, #tpu.memory_space<vmem>>, vector<8x1xf32>
    %57 = vector.broadcast %56 : vector<8x1xf32> to vector<8x128xf32>
    %58 = arith.addf %55, %57 : vector<8x128xf32>
    %cst_47 = arith.constant 0.000000e+00 : f32
    %59 = vector.broadcast %cst_47 : f32 to vector<8x128xf32>
    %60 = arith.maximumf %58, %59 : vector<8x128xf32>
    %c0_48 = arith.constant 0 : index
    %c0_49 = arith.constant 0 : index
    %61 = vector.load %arg10[%c0_48, %c0_49] : memref<64x8xf32, #tpu.memory_space<vmem>>, vector<64x8xf32>
    %cst_50 = arith.constant dense<0.000000e+00> : vector<64x128xf32>
    %62 = tpu.matmul %61, %60, %cst_50 {dimension_numbers = #tpu.dot_dimension_numbers<[1], [0], [0], [1], [0, 0, 1, 1], [], []>} : vector<64x8xf32>, vector<8x128xf32>, vector<64x128xf32> -> vector<64x128xf32>
    %63 = vector.extract_strided_slice %62 {offsets = [0, 0], sizes = [32, 128], strides = [1, 1]} : vector<64x128xf32> to vector<32x128xf32>
    %64 = arith.negf %63 : vector<32x128xf32>
    %65 = math.exp %64 : vector<32x128xf32>
    %cst_51 = arith.constant 1.000000e+00 : f32
    %66 = vector.broadcast %cst_51 : f32 to vector<32x128xf32>
    %67 = arith.addf %66, %65 : vector<32x128xf32>
    %68 = arith.divf %66, %67 : vector<32x128xf32>
    %69 = vector.extract_strided_slice %62 {offsets = [32, 0], sizes = [32, 128], strides = [1, 1]} : vector<64x128xf32> to vector<32x128xf32>
    %70 = arith.mulf %44, %68 : vector<32x128xf32>
    %71 = arith.addf %0, %70 : vector<32x128xf32>
    %72 = arith.addf %71, %69 : vector<32x128xf32>
    %cst_52 = arith.constant 0.000000e+00 : f32
    %73 = vector.broadcast %cst_52 : f32 to vector<32x128xf32>
    %74 = arith.maximumf %72, %73 : vector<32x128xf32>
    %c0_53 = arith.constant 0 : index
    %c0_54 = arith.constant 0 : index
    %75 = vector.load %arg11[%c0_53, %c0_54] : memref<32x128xf32, #tpu.memory_space<vmem>>, vector<32x128xf32>
    tpu.vector_store %arg11[%c0_53, %c0_54], %74 {strides = array<i32>} : memref<32x128xf32, #tpu.memory_space<vmem>>, vector<32x128xf32>,
    return
  }
  func.func @transform_0(%arg0: i32) -> (i32, i32) {
    %c0_i32 = arith.constant 0 : i32
    %c0_i32_0 = arith.constant 0 : i32
    return %c0_i32, %arg0 : i32, i32
  }
  func.func @transform_1(%arg0: i32) -> (i32, i32) {
    %c0_i32 = arith.constant 0 : i32
    %c0_i32_0 = arith.constant 0 : i32
    %c0_i32_1 = arith.constant 0 : i32
    return %c0_i32, %c0_i32_0 : i32, i32
  }
  func.func @transform_2(%arg0: i32) -> (i32, i32) {
    %c0_i32 = arith.constant 0 : i32
    %c0_i32_0 = arith.constant 0 : i32
    %c0_i32_1 = arith.constant 0 : i32
    return %c0_i32, %c0_i32_0 : i32, i32
  }
  func.func @transform_3(%arg0: i32) -> (i32, i32, i32) {
    %c0_i32 = arith.constant 0 : i32
    %c0_i32_0 = arith.constant 0 : i32
    %c0_i32_1 = arith.constant 0 : i32
    %c0_i32_2 = arith.constant 0 : i32
    return %c0_i32, %c0_i32_0, %c0_i32_1 : i32, i32, i32
  }
  func.func @transform_4(%arg0: i32) -> (i32, i32) {
    %c0_i32 = arith.constant 0 : i32
    %c0_i32_0 = arith.constant 0 : i32
    %c0_i32_1 = arith.constant 0 : i32
    return %c0_i32, %c0_i32_0 : i32, i32
  }
  func.func @transform_5(%arg0: i32) -> (i32, i32, i32) {
    %c0_i32 = arith.constant 0 : i32
    %c0_i32_0 = arith.constant 0 : i32
    %c0_i32_1 = arith.constant 0 : i32
    %c0_i32_2 = arith.constant 0 : i32
    return %c0_i32, %c0_i32_0, %c0_i32_1 : i32, i32, i32
  }
  func.func @transform_6(%arg0: i32) -> (i32, i32) {
    %c0_i32 = arith.constant 0 : i32
    %c0_i32_0 = arith.constant 0 : i32
    %c0_i32_1 = arith.constant 0 : i32
    return %c0_i32, %c0_i32_0 : i32, i32
  }
  func.func @transform_7(%arg0: i32) -> (i32, i32, i32) {
    %c0_i32 = arith.constant 0 : i32
    %c0_i32_0 = arith.constant 0 : i32
    %c0_i32_1 = arith.constant 0 : i32
    %c0_i32_2 = arith.constant 0 : i32
    return %c0_i32, %c0_i32_0, %c0_i32_1 : i32, i32, i32
  }
  func.func @transform_8(%arg0: i32) -> (i32, i32) {
    %c0_i32 = arith.constant 0 : i32
    %c0_i32_0 = arith.constant 0 : i32
    %c0_i32_1 = arith.constant 0 : i32
    return %c0_i32, %c0_i32_0 : i32, i32
  }
  func.func @transform_9(%arg0: i32) -> (i32, i32) {
    %c0_i32 = arith.constant 0 : i32
    %c0_i32_0 = arith.constant 0 : i32
    %c0_i32_1 = arith.constant 0 : i32
    return %c0_i32, %c0_i32_0 : i32, i32
  }
  func.func @transform_10(%arg0: i32) -> (i32, i32) {
    %c0_i32 = arith.constant 0 : i32
    %c0_i32_0 = arith.constant 0 : i32
    return %c0_i32, %arg0 : i32, i32
  }
}

</mosaic_0001>

<llo_original>
// kernel: resblock_forward.1
$region0: #{resblock_forward.1}
  #allocation0 [shape = 'u32[]', space=smem, size = 0x4, offset = 0x4, fixed_abs, tag = 'smem constant byte address 0x4 - core index']
  #allocation1 [shape = 'u32[144,128]{1,0:T(1,128)}', space=vmem, size = 0x12000, scoped, tag = 'internal scratch']
  %s0 = inlined_call_operand.vmem [shape: f32[32,128], index: 0, kind: input, shape index: {}]
  %s1 = inlined_call_operand.vmem [shape: f32[1,128], index: 1, kind: input, shape index: {}]
  %s2 = inlined_call_operand.vmem [shape: f32[1,128], index: 2, kind: input, shape index: {}]
  %s3 = inlined_call_operand.vmem [shape: f32[3,32,32], index: 3, kind: input, shape index: {}]
  %s4 = inlined_call_operand.vmem [shape: f32[32,1], index: 4, kind: input, shape index: {}]
  %s5 = inlined_call_operand.vmem [shape: f32[3,32,32], index: 5, kind: input, shape index: {}]
  %s6 = inlined_call_operand.vmem [shape: f32[32,1], index: 6, kind: input, shape index: {}]
  %s7 = inlined_call_operand.vmem [shape: f32[3,8,32], index: 7, kind: input, shape index: {}]
  %s8 = inlined_call_operand.vmem [shape: f32[8,1], index: 8, kind: input, shape index: {}]
  %s9 = inlined_call_operand.vmem [shape: f32[64,8], index: 9, kind: input, shape index: {}]
  %s10 = inlined_call_operand.vmem [shape: f32[32,128], index: 10, kind: output, shape index: {}]
  %s11 = sld [smem:[#allocation0]]
  $region50: #{resblock_forward.1} parent=0
    _
  %s13 = ssub.s32 1, %s11
  %s14 = scalar_select 0, %s13, %s11
  // Predicated region
  $region2: #{resblock_forward.1} parent=0 // pred_check
    _
  $region3: #{resblock_forward.1} parent=0 // pred_check_branch
    %16 = sbr.rel (0) target = $region5
  $region4: #{resblock_forward.1} parent=0 // pred_region
    _
  $region5: #{resblock_forward.1} parent=0 // pred_fallthru
    _
  // Predicated region
  $region6: #{resblock_forward.1} parent=0 // pred_check
    _
  $region7: #{resblock_forward.1} parent=0 // pred_check_branch
    %18 = sbr.rel (0) target = $region9
  $region8: #{resblock_forward.1} parent=0 // pred_region
    _
  $region9: #{resblock_forward.1} parent=0 // pred_fallthru
    _
  // Predicated region
  $region10: #{resblock_forward.1} parent=0 // pred_check
    _
  $region11: #{resblock_forward.1} parent=0 // pred_check_branch
    %20 = sbr.rel (0) target = $region13
  $region12: #{resblock_forward.1} parent=0 // pred_region
    _
  $region13: #{resblock_forward.1} parent=0 // pred_fallthru
    _
  // Predicated region
  $region14: #{resblock_forward.1} parent=0 // pred_check
    _
  $region15: #{resblock_forward.1} parent=0 // pred_check_branch
    %22 = sbr.rel (0) target = $region17
  $region16: #{resblock_forward.1} parent=0 // pred_region
    _
  $region17: #{resblock_forward.1} parent=0 // pred_fallthru
    _
  // Predicated region
  $region18: #{resblock_forward.1} parent=0 // pred_check
    _
  $region19: #{resblock_forward.1} parent=0 // pred_check_branch
    %24 = sbr.rel (0) target = $region21
  $region20: #{resblock_forward.1} parent=0 // pred_region
    _
  $region21: #{resblock_forward.1} parent=0 // pred_fallthru
    _
  // Predicated region
  $region22: #{resblock_forward.1} parent=0 // pred_check
    _
  $region23: #{resblock_forward.1} parent=0 // pred_check_branch
    %26 = sbr.rel (0) target = $region25
  $region24: #{resblock_forward.1} parent=0 // pred_region
    _
  $region25: #{resblock_forward.1} parent=0 // pred_fallthru
    _
  // Predicated region
  $region26: #{resblock_forward.1} parent=0 // pred_check
    _
  $region27: #{resblock_forward.1} parent=0 // pred_check_branch
    %28 = sbr.rel (0) target = $region29
  $region28: #{resblock_forward.1} parent=0 // pred_region
    _
  $region29: #{resblock_forward.1} parent=0 // pred_fallthru
    _
  // Predicated region
  $region30: #{resblock_forward.1} parent=0 // pred_check
    _
  $region31: #{resblock_forward.1} parent=0 // pred_check_branch
    %30 = sbr.rel (0) target = $region33
  $region32: #{resblock_forward.1} parent=0 // pred_region
    _
  $region33: #{resblock_forward.1} parent=0 // pred_fallthru
    _
  // Predicated region
  $region34: #{resblock_forward.1} parent=0 // pred_check
    _
  $region35: #{resblock_forward.1} parent=0 // pred_check_branch
    %32 = sbr.rel (0) target = $region37
  $region36: #{resblock_forward.1} parent=0 // pred_region
    _
  $region37: #{resblock_forward.1} parent=0 // pred_fallthru
    _
  // Predicated region
  $region38: #{resblock_forward.1} parent=0 // pred_check
    _
  $region39: #{resblock_forward.1} parent=0 // pred_check_branch
    %34 = sbr.rel (0) target = $region41
  $region40: #{resblock_forward.1} parent=0 // pred_region
    _
  $region41: #{resblock_forward.1} parent=0 // pred_fallthru
    _
  %v35 = vld [vmem:[%s0] sm:$0xff]
  %v36 = vld [vmem:[%s0 + $0x8] sm:$0xff]
  %v37 = vld [vmem:[%s0 + $0x10] sm:$0xff]
  %v38 = vld [vmem:[%s0 + $0x18] sm:$0xff]
  %v39 = vld [vmem:[%s1] sm:$0x1]
  %v40 = vld [vmem:[%s2] sm:$0x1]
  %41 = vrot.lane.b32.xlu0 %v35, 1
  %v42 = vpop.permute.xlu0 %41
  %43 = vrot.lane.b32.xlu0 %v36, 1
  %v44 = vpop.permute.xlu0 %43
  %45 = vrot.lane.b32.xlu0 %v37, 1
  %v46 = vpop.permute.xlu0 %45
  %47 = vrot.lane.b32.xlu0 %v38, 1
  %v48 = vpop.permute.xlu0 %47
  %v50 = vlaneseq
  %v51 = vshrl.u32 %v50, 7
  %v52 = vsub.s32 0, %v51
  %v53 = vrot.slane %v39, %v52
  %v55 = vmul.f32 %v42, %v53
  %v56 = vmul.f32 %v44, %v53
  %v57 = vmul.f32 %v46, %v53
  %v58 = vmul.f32 %v48, %v53
  %59 = vrot.lane.b32.xlu0 %v35, 127
  %v60 = vpop.permute.xlu0 %59
  %61 = vrot.lane.b32.xlu0 %v36, 127
  %v62 = vpop.permute.xlu0 %61
  %63 = vrot.lane.b32.xlu0 %v37, 127
  %v64 = vpop.permute.xlu0 %63
  %65 = vrot.lane.b32.xlu0 %v38, 127
  %v66 = vpop.permute.xlu0 %65
  %v68 = vlaneseq
  %v69 = vshrl.u32 %v68, 7
  %v70 = vsub.s32 0, %v69
  %v71 = vrot.slane %v40, %v70
  %v73 = vmul.f32 %v60, %v71
  %v74 = vmul.f32 %v62, %v71
  %v75 = vmul.f32 %v64, %v71
  %v76 = vmul.f32 %v66, %v71
  %v77 = vld [vmem:[%s3] sm:$0xff]
  %v78 = vld [vmem:[%s3 + $0x8] sm:$0xff]
  %v79 = vld [vmem:[%s3 + $0x10] sm:$0xff]
  %v80 = vld [vmem:[%s3 + $0x18] sm:$0xff]
  %s81 = scalar_lea.vmem %s3, 32
  %v82 = vld [vmem:[%s81] sm:$0xff]
  %v83 = vld [vmem:[%s81 + $0x8] sm:$0xff]
  %v84 = vld [vmem:[%s81 + $0x10] sm:$0xff]
  %v85 = vld [vmem:[%s81 + $0x18] sm:$0xff]
  %vm86 = vcmask 261120
  %v88 = vsel %vm86, %v82, 0
  %v91 = vsel %vm86, %v83, 0
  %v94 = vsel %vm86, %v84, 0
  %v97 = vsel %vm86, %v85, 0
  %99 = vmatprep.subr.mxu0 0.0
  %100 = vmatpush1.msra.mxu0 %v35
  %101 = vmatprep.subr.mxu0 0.0
  %102 = vmatpush1.msra.mxu0 %v36
  %103 = vmatprep.subr.mxu0 0.0
  %104 = vmatpush1.msra.mxu0 %v37
  %105 = vmatprep.subr.mxu0 0.0
  %106 = vmatpush1.msra.mxu0 %v38
  %107 = vmatprep.subr.mxu0 0.0
  %108 = vmatpush1.msra.mxu0 0.0
  %109 = vmatprep.subr.mxu0 0.0
  %110 = vmatpush1.msra.mxu0 0.0
  %111 = vmatprep.subr.mxu0 0.0
  %112 = vmatpush1.msra.mxu0 0.0
  %113 = vmatprep.subr.mxu0 0.0
  %114 = vmatpush1.msra.mxu0 0.0
  %115 = vmatprep.subr.mxu0 0.0
  %116 = vmatpush1.msra.mxu0 0.0
  %117 = vmatprep.subr.mxu0 0.0
  %118 = vmatpush1.msra.mxu0 0.0
  %119 = vmatprep.subr.mxu0 0.0
  %120 = vmatpush1.msra.mxu0 0.0
  %121 = vmatprep.subr.mxu0 0.0
  %122 = vmatpush1.msra.mxu0 0.0
  %123 = vmatprep.subr.mxu0 0.0
  %124 = vmatpush1.msra.mxu0 0.0
  %125 = vmatprep.subr.mxu0 0.0
  %126 = vmatpush1.msra.mxu0 0.0
  %127 = vmatprep.subr.mxu0 0.0
  %128 = vmatpush1.msra.mxu0 0.0
  %129 = vmatprep.subr.mxu0 0.0
  %130 = vmatpush1.msra.mxu0 0.0
  %131 = vmatprep.subr.mxu0 0.0
  %132 = vmatpush1.msra.mxu0 0.0
  %133 = vmatprep.subr.mxu0 0.0
  %134 = vmatpush1.msra.mxu0 0.0
  %135 = vmatprep.subr.mxu0 0.0
  %136 = vmatpush1.msra.mxu0 0.0
  %137 = vmatprep.subr.mxu0 0.0
  %138 = vmatpush1.msra.mxu0 0.0
  %139 = vmatprep.subr.mxu0 0.0
  %140 = vmatpush1.msra.mxu0 0.0
  %141 = vmatprep.subr.mxu0 0.0
  %142 = vmatpush1.msra.mxu0 0.0
  %143 = vmatprep.subr.mxu0 0.0
  %144 = vmatpush1.msra.mxu0 0.0
  %145 = vmatprep.subr.mxu0 0.0
  %146 = vmatpush1.msra.mxu0 0.0
  %147 = vmatprep.subr.mxu0 0.0
  %148 = vmatpush1.msra.mxu0 0.0
  %149 = vmatprep.subr.mxu0 0.0
  %150 = vmatpush1.msra.mxu0 0.0
  %151 = vmatprep.subr.mxu0 0.0
  %152 = vmatpush1.msra.mxu0 0.0
  %153 = vmatprep.subr.mxu0 0.0
  %154 = vmatpush1.msra.mxu0 0.0
  %155 = vmatprep.subr.mxu0 0.0
  %156 = vmatpush1.msra.mxu0 0.0
  %157 = vmatprep.subr.mxu0 0.0
  %158 = vmatpush1.msra.mxu0 0.0
  %159 = vmatprep.subr.mxu0 0.0
  %160 = vmatpush1.msra.mxu0 0.0
  %161 = vmatprep.subr.mxu0 0.0
  %162 = vmatpush1.msra.mxu0 0.0
  %163 = vmatprep.mubr.f32.mxu0 0.0
  %164 = vmatmul.mubr.f32.gmra.mrb[0].mxu0 %v88
  %v165 = vpop.f32.mrb[0].mxu0
  %v166 = vadd.f32 0.0, %v165
  %v167 = vpop.f32.mrb[0].mxu0
  %168 = vmatprep.mubr.f32.mxu0 0.0
  %169 = vmatmul.mubr.f32.gmra.mrb[0].mxu0 %v91
  %v170 = vpop.f32.mrb[0].mxu0
  %v171 = vadd.f32 0.0, %v170
  %v172 = vpop.f32.mrb[0].mxu0
  %173 = vmatprep.mubr.f32.mxu0 0.0
  %174 = vmatmul.mubr.f32.gmra.mrb[0].mxu0 %v94
  %v175 = vpop.f32.mrb[0].mxu0
  %v176 = vadd.f32 0.0, %v175
  %v177 = vpop.f32.mrb[0].mxu0
  %178 = vmatprep.mubr.f32.mxu0 0.0
  %179 = vmatmul.mubr.f32.gmra.mrb[0].mxu0 %v97
  %v180 = vpop.f32.mrb[0].mxu0
  %v181 = vadd.f32 0.0, %v180
  %v182 = vpop.f32.mrb[0].mxu0
  %183 = vdwg.mxu0
  %v185 = vsel %vm86, %v77, 0
  %v188 = vsel %vm86, %v78, 0
  %v191 = vsel %vm86, %v79, 0
  %v194 = vsel %vm86, %v80, 0
  %196 = vmatprep.subr.mxu0 0.0
  %197 = vmatpush1.msra.mxu0 %v55
  %198 = vmatprep.subr.mxu0 0.0
  %199 = vmatpush1.msra.mxu0 %v56
  %200 = vmatprep.subr.mxu0 0.0
  %201 = vmatpush1.msra.mxu0 %v57
  %202 = vmatprep.subr.mxu0 0.0
  %203 = vmatpush1.msra.mxu0 %v58
  %204 = vmatprep.subr.mxu0 0.0
  %205 = vmatpush1.msra.mxu0 0.0
  %206 = vmatprep.subr.mxu0 0.0
  %207 = vmatpush1.msra.mxu0 0.0
  %208 = vmatprep.subr.mxu0 0.0
  %209 = vmatpush1.msra.mxu0 0.0
  %210 = vmatprep.subr.mxu0 0.0
  %211 = vmatpush1.msra.mxu0 0.0
  %212 = vmatprep.subr.mxu0 0.0
  %213 = vmatpush1.msra.mxu0 0.0
  %214 = vmatprep.subr.mxu0 0.0
  %215 = vmatpush1.msra.mxu0 0.0
  %216 = vmatprep.subr.mxu0 0.0
  %217 = vmatpush1.msra.mxu0 0.0
  %218 = vmatprep.subr.mxu0 0.0
  %219 = vmatpush1.msra.mxu0 0.0
  %220 = vmatprep.subr.mxu0 0.0
  %221 = vmatpush1.msra.mxu0 0.0
  %222 = vmatprep.subr.mxu0 0.0
  %223 = vmatpush1.msra.mxu0 0.0
  %224 = vmatprep.subr.mxu0 0.0
  %225 = vmatpush1.msra.mxu0 0.0
  %226 = vmatprep.subr.mxu0 0.0
  %227 = vmatpush1.msra.mxu0 0.0
  %228 = vmatprep.subr.mxu0 0.0
  %229 = vmatpush1.msra.mxu0 0.0
  %230 = vmatprep.subr.mxu0 0.0
  %231 = vmatpush1.msra.mxu0 0.0
  %232 = vmatprep.subr.mxu0 0.0
  %233 = vmatpush1.msra.mxu0 0.0
  %234 = vmatprep.subr.mxu0 0.0
  %235 = vmatpush1.msra.mxu0 0.0
  %236 = vmatprep.subr.mxu0 0.0
  %237 = vmatpush1.msra.mxu0 0.0
  %238 = vmatprep.subr.mxu0 0.0
  %239 = vmatpush1.msra.mxu0 0.0
  %240 = vmatprep.subr.mxu0 0.0
  %241 = vmatpush1.msra.mxu0 0.0
  %242 = vmatprep.subr.mxu0 0.0
  %243 = vmatpush1.msra.mxu0 0.0
  %244 = vmatprep.subr.mxu0 0.0
  %245 = vmatpush1.msra.mxu0 0.0
  %246 = vmatprep.subr.mxu0 0.0
  %247 = vmatpush1.msra.mxu0 0.0
  %248 = vmatprep.subr.mxu0 0.0
  %249 = vmatpush1.msra.mxu0 0.0
  %250 = vmatprep.subr.mxu0 0.0
  %251 = vmatpush1.msra.mxu0 0.0
  %252 = vmatprep.subr.mxu0 0.0
  %253 = vmatpush1.msra.mxu0 0.0
  %254 = vmatprep.subr.mxu0 0.0
  %255 = vmatpush1.msra.mxu0 0.0
  %256 = vmatprep.subr.mxu0 0.0
  %257 = vmatpush1.msra.mxu0 0.0
  %258 = vmatprep.subr.mxu0 0.0
  %259 = vmatpush1.msra.mxu0 0.0
  %260 = vmatprep.mubr.f32.mxu0 0.0
  %261 = vmatmul.mubr.f32.gmra.mrb[0].mxu0 %v185
  %v262 = vpop.f32.mrb[0].mxu0
  %v263 = vadd.f32 %v166, %v262
  %v264 = vpop.f32.mrb[0].mxu0
  %265 = vmatprep.mubr.f32.mxu0 0.0
  %266 = vmatmul.mubr.f32.gmra.mrb[0].mxu0 %v188
  %v267 = vpop.f32.mrb[0].mxu0
  %v268 = vadd.f32 %v171, %v267
  %v269 = vpop.f32.mrb[0].mxu0
  %270 = vmatprep.mubr.f32.mxu0 0.0
  %271 = vmatmul.mubr.f32.gmra.mrb[0].mxu0 %v191
  %v272 = vpop.f32.mrb[0].mxu0
  %v273 = vadd.f32 %v176, %v272
  %v274 = vpop.f32.mrb[0].mxu0
  %275 = vmatprep.mubr.f32.mxu0 0.0
  %276 = vmatmul.mubr.f32.gmra.mrb[0].mxu0 %v194
  %v277 = vpop.f32.mrb[0].mxu0
  %v278 = vadd.f32 %v181, %v277
  %v279 = vpop.f32.mrb[0].mxu0
  %280 = vdwg.mxu0
  %s281 = scalar_lea.vmem %s3, 64
  %v282 = vld [vmem:[%s281] sm:$0xff]
  %v283 = vld [vmem:[%s281 + $0x8] sm:$0xff]
  %v284 = vld [vmem:[%s281 + $0x10] sm:$0xff]
  %v285 = vld [vmem:[%s281 + $0x18] sm:$0xff]
  %v287 = vsel %vm86, %v282, 0
  %v290 = vsel %vm86, %v283, 0
  %v293 = vsel %vm86, %v284, 0
  %v296 = vsel %vm86, %v285, 0
  %298 = vmatprep.subr.mxu0 0.0
  %299 = vmatpush1.msra.mxu0 %v73
  %300 = vmatprep.subr.mxu0 0.0
  %301 = vmatpush1.msra.mxu0 %v74
  %302 = vmatprep.subr.mxu0 0.0
  %303 = vmatpush1.msra.mxu0 %v75
  %304 = vmatprep.subr.mxu0 0.0
  %305 = vmatpush1.msra.mxu0 %v76
  %306 = vmatprep.subr.mxu0 0.0
  %307 = vmatpush1.msra.mxu0 0.0
  %308 = vmatprep.subr.mxu0 0.0
  %309 = vmatpush1.msra.mxu0 0.0
  %310 = vmatprep.subr.mxu0 0.0
  %311 = vmatpush1.msra.mxu0 0.0
  %312 = vmatprep.subr.mxu0 0.0
  %313 = vmatpush1.msra.mxu0 0.0
  %314 = vmatprep.subr.mxu0 0.0
  %315 = vmatpush1.msra.mxu0 0.0
  %316 = vmatprep.subr.mxu0 0.0
  %317 = vmatpush1.msra.mxu0 0.0
  %318 = vmatprep.subr.mxu0 0.0
  %319 = vmatpush1.msra.mxu0 0.0
  %320 = vmatprep.subr.mxu0 0.0
  %321 = vmatpush1.msra.mxu0 0.0
  %322 = vmatprep.subr.mxu0 0.0
  %323 = vmatpush1.msra.mxu0 0.0
  %324 = vmatprep.subr.mxu0 0.0
  %325 = vmatpush1.msra.mxu0 0.0
  %326 = vmatprep.subr.mxu0 0.0
  %327 = vmatpush1.msra.mxu0 0.0
  %328 = vmatprep.subr.mxu0 0.0
  %329 = vmatpush1.msra.mxu0 0.0
  %330 = vmatprep.subr.mxu0 0.0
  %331 = vmatpush1.msra.mxu0 0.0
  %332 = vmatprep.subr.mxu0 0.0
  %333 = vmatpush1.msra.mxu0 0.0
  %334 = vmatprep.subr.mxu0 0.0
  %335 = vmatpush1.msra.mxu0 0.0
  %336 = vmatprep.subr.mxu0 0.0
  %337 = vmatpush1.msra.mxu0 0.0
  %338 = vmatprep.subr.mxu0 0.0
  %339 = vmatpush1.msra.mxu0 0.0
  %340 = vmatprep.subr.mxu0 0.0
  %341 = vmatpush1.msra.mxu0 0.0
  %342 = vmatprep.subr.mxu0 0.0
  %343 = vmatpush1.msra.mxu0 0.0
  %344 = vmatprep.subr.mxu0 0.0
  %345 = vmatpush1.msra.mxu0 0.0
  %346 = vmatprep.subr.mxu0 0.0
  %347 = vmatpush1.msra.mxu0 0.0
  %348 = vmatprep.subr.mxu0 0.0
  %349 = vmatpush1.msra.mxu0 0.0
  %350 = vmatprep.subr.mxu0 0.0
  %351 = vmatpush1.msra.mxu0 0.0
  %352 = vmatprep.subr.mxu0 0.0
  %353 = vmatpush1.msra.mxu0 0.0
  %354 = vmatprep.subr.mxu0 0.0
  %355 = vmatpush1.msra.mxu0 0.0
  %356 = vmatprep.subr.mxu0 0.0
  %357 = vmatpush1.msra.mxu0 0.0
  %358 = vmatprep.subr.mxu0 0.0
  %359 = vmatpush1.msra.mxu0 0.0
  %360 = vmatprep.subr.mxu0 0.0
  %361 = vmatpush1.msra.mxu0 0.0
  %362 = vmatprep.mubr.f32.mxu0 0.0
  %363 = vmatmul.mubr.f32.gmra.mrb[0].mxu0 %v287
  %v364 = vpop.f32.mrb[0].mxu0
  %v365 = vadd.f32 0.0, %v364
  %v366 = vpop.f32.mrb[0].mxu0
  %367 = vmatprep.mubr.f32.mxu0 0.0
  %368 = vmatmul.mubr.f32.gmra.mrb[0].mxu0 %v290
  %v369 = vpop.f32.mrb[0].mxu0
  %v370 = vadd.f32 0.0, %v369
  %v371 = vpop.f32.mrb[0].mxu0
  %372 = vmatprep.mubr.f32.mxu0 0.0
  %373 = vmatmul.mubr.f32.gmra.mrb[0].mxu0 %v293
  %v374 = vpop.f32.mrb[0].mxu0
  %v375 = vadd.f32 0.0, %v374
  %v376 = vpop.f32.mrb[0].mxu0
  %377 = vmatprep.mubr.f32.mxu0 0.0
  %378 = vmatmul.mubr.f32.gmra.mrb[0].mxu0 %v296
  %v379 = vpop.f32.mrb[0].mxu0
  %v380 = vadd.f32 0.0, %v379
  %v381 = vpop.f32.mrb[0].mxu0
  %382 = vdwg.mxu0
  %v383 = vadd.f32 %v263, %v365
  %v384 = vadd.f32 %v268, %v370
  %v385 = vadd.f32 %v273, %v375
  %v386 = vadd.f32 %v278, %v380
  %v387 = vld [vmem:[%s4] sm:$0xff]
  %v388 = vld [vmem:[%s4 + $0x8] sm:$0xff]
  %v389 = vld [vmem:[%s4 + $0x10] sm:$0xff]
  %v390 = vld [vmem:[%s4 + $0x18] sm:$0xff]
  %392 = vset.pattern.permute.xlu0 0
  %393 = vperm.xlu0 %392, %v387
  %v394 = vpop.permute.xlu0 %393
  %397 = vset.pattern.permute.xlu0 0
  %398 = vperm.xlu0 %397, %v388
  %v399 = vpop.permute.xlu0 %398
  %402 = vset.pattern.permute.xlu0 0
  %403 = vperm.xlu0 %402, %v389
  %v404 = vpop.permute.xlu0 %403
  %407 = vset.pattern.permute.xlu0 0
  %408 = vperm.xlu0 %407, %v390
  %v409 = vpop.permute.xlu0 %408
  %v411 = vadd.f32 %v383, %v394
  %v412 = vadd.f32 %v384, %v399
  %v413 = vadd.f32 %v385, %v404
  %v414 = vadd.f32 %v386, %v409
  %v415 = vmax.f32 %v411, 0.0
  %v416 = vmax.f32 %v412, 0.0
  %v417 = vmax.f32 %v413, 0.0
  %v418 = vmax.f32 %v414, 0.0
  %419 = vrot.lane.b32.xlu0 %v415, 1
  %v420 = vpop.permute.xlu0 %419
  %421 = vrot.lane.b32.xlu0 %v416, 1
  %v422 = vpop.permute.xlu0 %421
  %423 = vrot.lane.b32.xlu0 %v417, 1
  %v424 = vpop.permute.xlu0 %423
  %425 = vrot.lane.b32.xlu0 %v418, 1
  %v426 = vpop.permute.xlu0 %425
  %v427 = vmul.f32 %v420, %v53
  %v428 = vmul.f32 %v422, %v53
  %v429 = vmul.f32 %v424, %v53
  %v430 = vmul.f32 %v426, %v53
  %431 = vrot.lane.b32.xlu0 %v415, 127
  %v432 = vpop.permute.xlu0 %431
  %433 = vrot.lane.b32.xlu0 %v416, 127
  %v434 = vpop.permute.xlu0 %433
  %435 = vrot.lane.b32.xlu0 %v417, 127
  %v436 = vpop.permute.xlu0 %435
  %437 = vrot.lane.b32.xlu0 %v418, 127
  %v438 = vpop.permute.xlu0 %437
  %v439 = vmul.f32 %v432, %v71
  %v440 = vmul.f32 %v434, %v71
  %v441 = vmul.f32 %v436, %v71
  %v442 = vmul.f32 %v438, %v71
  %v443 = vld [vmem:[%s5] sm:$0xff]
  %v444 = vld [vmem:[%s5 + $0x8] sm:$0xff]
  %v445 = vld [vmem:[%s5 + $0x10] sm:$0xff]
  %v446 = vld [vmem:[%s5 + $0x18] sm:$0xff]
  %s447 = scalar_lea.vmem %s5, 32
  %v448 = vld [vmem:[%s447] sm:$0xff]
  %v449 = vld [vmem:[%s447 + $0x8] sm:$0xff]
  %v450 = vld [vmem:[%s447 + $0x10] sm:$0xff]
  %v451 = vld [vmem:[%s447 + $0x18] sm:$0xff]
  %v453 = vsel %vm86, %v448, 0
  %v456 = vsel %vm86, %v449, 0
  %v459 = vsel %vm86, %v450, 0
  %v462 = vsel %vm86, %v451, 0
  %464 = vmatprep.subr.mxu0 0.0
  %465 = vmatpush1.msra.mxu0 %v415
  %466 = vmatprep.subr.mxu0 0.0
  %467 = vmatpush1.msra.mxu0 %v416
  %468 = vmatprep.subr.mxu0 0.0
  %469 = vmatpush1.msra.mxu0 %v417
  %470 = vmatprep.subr.mxu0 0.0
  %471 = vmatpush1.msra.mxu0 %v418
  %472 = vmatprep.subr.mxu0 0.0
  %473 = vmatpush1.msra.mxu0 0.0
  %474 = vmatprep.subr.mxu0 0.0
  %475 = vmatpush1.msra.mxu0 0.0
  %476 = vmatprep.subr.mxu0 0.0
  %477 = vmatpush1.msra.mxu0 0.0
  %478 = vmatprep.subr.mxu0 0.0
  %479 = vmatpush1.msra.mxu0 0.0
  %480 = vmatprep.subr.mxu0 0.0
  %481 = vmatpush1.msra.mxu0 0.0
  %482 = vmatprep.subr.mxu0 0.0
  %483 = vmatpush1.msra.mxu0 0.0
  %484 = vmatprep.subr.mxu0 0.0
  %485 = vmatpush1.msra.mxu0 0.0
  %486 = vmatprep.subr.mxu0 0.0
  %487 = vmatpush1.msra.mxu0 0.0
  %488 = vmatprep.subr.mxu0 0.0
  %489 = vmatpush1.msra.mxu0 0.0
  %490 = vmatprep.subr.mxu0 0.0
  %491 = vmatpush1.msra.mxu0 0.0
  %492 = vmatprep.subr.mxu0 0.0
  %493 = vmatpush1.msra.mxu0 0.0
  %494 = vmatprep.subr.mxu0 0.0
  %495 = vmatpush1.msra.mxu0 0.0
  %496 = vmatprep.subr.mxu0 0.0
  %497 = vmatpush1.msra.mxu0 0.0
  %498 = vmatprep.subr.mxu0 0.0
  %499 = vmatpush1.msra.mxu0 0.0
  %500 = vmatprep.subr.mxu0 0.0
  %501 = vmatpush1.msra.mxu0 0.0
  %502 = vmatprep.subr.mxu0 0.0
  %503 = vmatpush1.msra.mxu0 0.0
  %504 = vmatprep.subr.mxu0 0.0
  %505 = vmatpush1.msra.mxu0 0.0
  %506 = vmatprep.subr.mxu0 0.0
  %507 = vmatpush1.msra.mxu0 0.0
  %508 = vmatprep.subr.mxu0 0.0
  %509 = vmatpush1.msra.mxu0 0.0
  %510 = vmatprep.subr.mxu0 0.0
  %511 = vmatpush1.msra.mxu0 0.0
  %512 = vmatprep.subr.mxu0 0.0
  %513 = vmatpush1.msra.mxu0 0.0
  %514 = vmatprep.subr.mxu0 0.0
  %515 = vmatpush1.msra.mxu0 0.0
  %516 = vmatprep.subr.mxu0 0.0
  %517 = vmatpush1.msra.mxu0 0.0
  %518 = vmatprep.subr.mxu0 0.0
  %519 = vmatpush1.msra.mxu0 0.0
  %520 = vmatprep.subr.mxu0 0.0
  %521 = vmatpush1.msra.mxu0 0.0
  %522 = vmatprep.subr.mxu0 0.0
  %523 = vmatpush1.msra.mxu0 0.0
  %524 = vmatprep.subr.mxu0 0.0
  %525 = vmatpush1.msra.mxu0 0.0
  %526 = vmatprep.subr.mxu0 0.0
  %527 = vmatpush1.msra.mxu0 0.0
  %528 = vmatprep.mubr.f32.mxu0 0.0
  %529 = vmatmul.mubr.f32.gmra.mrb[0].mxu0 %v453
  %v530 = vpop.f32.mrb[0].mxu0
  %v531 = vadd.f32 0.0, %v530
  %v532 = vpop.f32.mrb[0].mxu0
  %533 = vmatprep.mubr.f32.mxu0 0.0
  %534 = vmatmul.mubr.f32.gmra.mrb[0].mxu0 %v456
  %v535 = vpop.f32.mrb[0].mxu0
  %v536 = vadd.f32 0.0, %v535
  %v537 = vpop.f32.mrb[0].mxu0
  %538 = vmatprep.mubr.f32.mxu0 0.0
  %539 = vmatmul.mubr.f32.gmra.mrb[0].mxu0 %v459
  %v540 = vpop.f32.mrb[0].mxu0
  %v541 = vadd.f32 0.0, %v540
  %v542 = vpop.f32.mrb[0].mxu0
  %543 = vmatprep.mubr.f32.mxu0 0.0
  %544 = vmatmul.mubr.f32.gmra.mrb[0].mxu0 %v462
  %v545 = vpop.f32.mrb[0].mxu0
  %v546 = vadd.f32 0.0, %v545
  %v547 = vpop.f32.mrb[0].mxu0
  %548 = vdwg.mxu0
  %v550 = vsel %vm86, %v443, 0
  %v553 = vsel %vm86, %v444, 0
  %v556 = vsel %vm86, %v445, 0
  %v559 = vsel %vm86, %v446, 0
  %561 = vmatprep.subr.mxu0 0.0
  %562 = vmatpush1.msra.mxu0 %v427
  %563 = vmatprep.subr.mxu0 0.0
  %564 = vmatpush1.msra.mxu0 %v428
  %565 = vmatprep.subr.mxu0 0.0
  %566 = vmatpush1.msra.mxu0 %v429
  %567 = vmatprep.subr.mxu0 0.0
  %568 = vmatpush1.msra.mxu0 %v430
  %569 = vmatprep.subr.mxu0 0.0
  %570 = vmatpush1.msra.mxu0 0.0
  %571 = vmatprep.subr.mxu0 0.0
  %572 = vmatpush1.msra.mxu0 0.0
  %573 = vmatprep.subr.mxu0 0.0
  %574 = vmatpush1.msra.mxu0 0.0
  %575 = vmatprep.subr.mxu0 0.0
  %576 = vmatpush1.msra.mxu0 0.0
  %577 = vmatprep.subr.mxu0 0.0
  %578 = vmatpush1.msra.mxu0 0.0
  %579 = vmatprep.subr.mxu0 0.0
  %580 = vmatpush1.msra.mxu0 0.0
  %581 = vmatprep.subr.mxu0 0.0
  %582 = vmatpush1.msra.mxu0 0.0
  %583 = vmatprep.subr.mxu0 0.0
  %584 = vmatpush1.msra.mxu0 0.0
  %585 = vmatprep.subr.mxu0 0.0
  %586 = vmatpush1.msra.mxu0 0.0
  %587 = vmatprep.subr.mxu0 0.0
  %588 = vmatpush1.msra.mxu0 0.0
  %589 = vmatprep.subr.mxu0 0.0
  %590 = vmatpush1.msra.mxu0 0.0
  %591 = vmatprep.subr.mxu0 0.0
  %592 = vmatpush1.msra.mxu0 0.0
  %593 = vmatprep.subr.mxu0 0.0
  %594 = vmatpush1.msra.mxu0 0.0
  %595 = vmatprep.subr.mxu0 0.0
  %596 = vmatpush1.msra.mxu0 0.0
  %597 = vmatprep.subr.mxu0 0.0
  %598 = vmatpush1.msra.mxu0 0.0
  %599 = vmatprep.subr.mxu0 0.0
  %600 = vmatpush1.msra.mxu0 0.0
  %601 = vmatprep.subr.mxu0 0.0
  %602 = vmatpush1.msra.mxu0 0.0
  %603 = vmatprep.subr.mxu0 0.0
  %604 = vmatpush1.msra.mxu0 0.0
  %605 = vmatprep.subr.mxu0 0.0
  %606 = vmatpush1.msra.mxu0 0.0
  %607 = vmatprep.subr.mxu0 0.0
  %608 = vmatpush1.msra.mxu0 0.0
  %609 = vmatprep.subr.mxu0 0.0
  %610 = vmatpush1.msra.mxu0 0.0
  %611 = vmatprep.subr.mxu0 0.0
  %612 = vmatpush1.msra.mxu0 0.0
  %613 = vmatprep.subr.mxu0 0.0
  %614 = vmatpush1.msra.mxu0 0.0
  %615 = vmatprep.subr.mxu0 0.0
  %616 = vmatpush1.msra.mxu0 0.0
  %617 = vmatprep.subr.mxu0 0.0
  %618 = vmatpush1.msra.mxu0 0.0
  %619 = vmatprep.subr.mxu0 0.0
  %620 = vmatpush1.msra.mxu0 0.0
  %621 = vmatprep.subr.mxu0 0.0
  %622 = vmatpush1.msra.mxu0 0.0
  %623 = vmatprep.subr.mxu0 0.0
  %624 = vmatpush1.msra.mxu0 0.0
  %625 = vmatprep.mubr.f32.mxu0 0.0
  %626 = vmatmul.mubr.f32.gmra.mrb[0].mxu0 %v550
  %v627 = vpop.f32.mrb[0].mxu0
  %v628 = vadd.f32 %v531, %v627
  %v629 = vpop.f32.mrb[0].mxu0
  %630 = vmatprep.mubr.f32.mxu0 0.0
  %631 = vmatmul.mubr.f32.gmra.mrb[0].mxu0 %v553
  %v632 = vpop.f32.mrb[0].mxu0
  %v633 = vadd.f32 %v536, %v632
  %v634 = vpop.f32.mrb[0].mxu0
  %635 = vmatprep.mubr.f32.mxu0 0.0
  %636 = vmatmul.mubr.f32.gmra.mrb[0].mxu0 %v556
  %v637 = vpop.f32.mrb[0].mxu0
  %v638 = vadd.f32 %v541, %v637
  %v639 = vpop.f32.mrb[0].mxu0
  %640 = vmatprep.mubr.f32.mxu0 0.0
  %641 = vmatmul.mubr.f32.gmra.mrb[0].mxu0 %v559
  %v642 = vpop.f32.mrb[0].mxu0
  %v643 = vadd.f32 %v546, %v642
  %v644 = vpop.f32.mrb[0].mxu0
  %645 = vdwg.mxu0
  %s646 = scalar_lea.vmem %s5, 64
  %v647 = vld [vmem:[%s646] sm:$0xff]
  %v648 = vld [vmem:[%s646 + $0x8] sm:$0xff]
  %v649 = vld [vmem:[%s646 + $0x10] sm:$0xff]
  %v650 = vld [vmem:[%s646 + $0x18] sm:$0xff]
  %v652 = vsel %vm86, %v647, 0
  %v655 = vsel %vm86, %v648, 0
  %v658 = vsel %vm86, %v649, 0
  %v661 = vsel %vm86, %v650, 0
  %663 = vmatprep.subr.mxu0 0.0
  %664 = vmatpush1.msra.mxu0 %v439
  %665 = vmatprep.subr.mxu0 0.0
  %666 = vmatpush1.msra.mxu0 %v440
  %667 = vmatprep.subr.mxu0 0.0
  %668 = vmatpush1.msra.mxu0 %v441
  %669 = vmatprep.subr.mxu0 0.0
  %670 = vmatpush1.msra.mxu0 %v442
  %671 = vmatprep.subr.mxu0 0.0
  %672 = vmatpush1.msra.mxu0 0.0
  %673 = vmatprep.subr.mxu0 0.0
  %674 = vmatpush1.msra.mxu0 0.0
  %675 = vmatprep.subr.mxu0 0.0
  %676 = vmatpush1.msra.mxu0 0.0
  %677 = vmatprep.subr.mxu0 0.0
  %678 = vmatpush1.msra.mxu0 0.0
  %679 = vmatprep.subr.mxu0 0.0
  %680 = vmatpush1.msra.mxu0 0.0
  %681 = vmatprep.subr.mxu0 0.0
  %682 = vmatpush1.msra.mxu0 0.0
  %683 = vmatprep.subr.mxu0 0.0
  %684 = vmatpush1.msra.mxu0 0.0
  %685 = vmatprep.subr.mxu0 0.0
  %686 = vmatpush1.msra.mxu0 0.0
  %687 = vmatprep.subr.mxu0 0.0
  %688 = vmatpush1.msra.mxu0 0.0
  %689 = vmatprep.subr.mxu0 0.0
  %690 = vmatpush1.msra.mxu0 0.0
  %691 = vmatprep.subr.mxu0 0.0
  %692 = vmatpush1.msra.mxu0 0.0
  %693 = vmatprep.subr.mxu0 0.0
  %694 = vmatpush1.msra.mxu0 0.0
  %695 = vmatprep.subr.mxu0 0.0
  %696 = vmatpush1.msra.mxu0 0.0
  %697 = vmatprep.subr.mxu0 0.0
  %698 = vmatpush1.msra.mxu0 0.0
  %699 = vmatprep.subr.mxu0 0.0
  %700 = vmatpush1.msra.mxu0 0.0
  %701 = vmatprep.subr.mxu0 0.0
  %702 = vmatpush1.msra.mxu0 0.0
  %703 = vmatprep.subr.mxu0 0.0
  %704 = vmatpush1.msra.mxu0 0.0
  %705 = vmatprep.subr.mxu0 0.0
  %706 = vmatpush1.msra.mxu0 0.0
  %707 = vmatprep.subr.mxu0 0.0
  %708 = vmatpush1.msra.mxu0 0.0
  %709 = vmatprep.subr.mxu0 0.0
  %710 = vmatpush1.msra.mxu0 0.0
  %711 = vmatprep.subr.mxu0 0.0
  %712 = vmatpush1.msra.mxu0 0.0
  %713 = vmatprep.subr.mxu0 0.0
  %714 = vmatpush1.msra.mxu0 0.0
  %715 = vmatprep.subr.mxu0 0.0
  %716 = vmatpush1.msra.mxu0 0.0
  %717 = vmatprep.subr.mxu0 0.0
  %718 = vmatpush1.msra.mxu0 0.0
  %719 = vmatprep.subr.mxu0 0.0
  %720 = vmatpush1.msra.mxu0 0.0
  %721 = vmatprep.subr.mxu0 0.0
  %722 = vmatpush1.msra.mxu0 0.0
  %723 = vmatprep.subr.mxu0 0.0
  %724 = vmatpush1.msra.mxu0 0.0
  %725 = vmatprep.subr.mxu0 0.0
  %726 = vmatpush1.msra.mxu0 0.0
  %727 = vmatprep.mubr.f32.mxu0 0.0
  %728 = vmatmul.mubr.f32.gmra.mrb[0].mxu0 %v652
  %v729 = vpop.f32.mrb[0].mxu0
  %v730 = vadd.f32 0.0, %v729
  %v731 = vpop.f32.mrb[0].mxu0
  %732 = vmatprep.mubr.f32.mxu0 0.0
  %733 = vmatmul.mubr.f32.gmra.mrb[0].mxu0 %v655
  %v734 = vpop.f32.mrb[0].mxu0
  %v735 = vadd.f32 0.0, %v734
  %v736 = vpop.f32.mrb[0].mxu0
  %737 = vmatprep.mubr.f32.mxu0 0.0
  %738 = vmatmul.mubr.f32.gmra.mrb[0].mxu0 %v658
  %v739 = vpop.f32.mrb[0].mxu0
  %v740 = vadd.f32 0.0, %v739
  %v741 = vpop.f32.mrb[0].mxu0
  %742 = vmatprep.mubr.f32.mxu0 0.0
  %743 = vmatmul.mubr.f32.gmra.mrb[0].mxu0 %v661
  %v744 = vpop.f32.mrb[0].mxu0
  %v745 = vadd.f32 0.0, %v744
  %v746 = vpop.f32.mrb[0].mxu0
  %747 = vdwg.mxu0
  %v748 = vadd.f32 %v628, %v730
  %v749 = vadd.f32 %v633, %v735
  %v750 = vadd.f32 %v638, %v740
  %v751 = vadd.f32 %v643, %v745
  %v752 = vld [vmem:[%s6] sm:$0xff]
  %v753 = vld [vmem:[%s6 + $0x8] sm:$0xff]
  %v754 = vld [vmem:[%s6 + $0x10] sm:$0xff]
  %v755 = vld [vmem:[%s6 + $0x18] sm:$0xff]
  %757 = vset.pattern.permute.xlu0 0
  %758 = vperm.xlu0 %757, %v752
  %v759 = vpop.permute.xlu0 %758
  %762 = vset.pattern.permute.xlu0 0
  %763 = vperm.xlu0 %762, %v753
  %v764 = vpop.permute.xlu0 %763
  %767 = vset.pattern.permute.xlu0 0
  %768 = vperm.xlu0 %767, %v754
  %v769 = vpop.permute.xlu0 %768
  %772 = vset.pattern.permute.xlu0 0
  %773 = vperm.xlu0 %772, %v755
  %v774 = vpop.permute.xlu0 %773
  %v776 = vadd.f32 %v748, %v759
  %v777 = vadd.f32 %v749, %v764
  %v778 = vadd.f32 %v750, %v769
  %v779 = vadd.f32 %v751, %v774
  %v780 = vld [vmem:[%s7] sm:$0xff]
  %s781 = scalar_lea.vmem %s7, 8
  %v782 = vld [vmem:[%s781] sm:$0xff]
  %v784 = vsel %vm86, %v782, 0
  %786 = vmatprep.subr.mxu0 0.0
  %787 = vmatpush1.msra.mxu0 %v415
  %788 = vmatprep.subr.mxu0 0.0
  %789 = vmatpush1.msra.mxu0 %v416
  %790 = vmatprep.subr.mxu0 0.0
  %791 = vmatpush1.msra.mxu0 %v417
  %792 = vmatprep.subr.mxu0 0.0
  %793 = vmatpush1.msra.mxu0 %v418
  %794 = vmatprep.subr.mxu0 0.0
  %795 = vmatpush1.msra.mxu0 0.0
  %796 = vmatprep.subr.mxu0 0.0
  %797 = vmatpush1.msra.mxu0 0.0
  %798 = vmatprep.subr.mxu0 0.0
  %799 = vmatpush1.msra.mxu0 0.0
  %800 = vmatprep.subr.mxu0 0.0
  %801 = vmatpush1.msra.mxu0 0.0
  %802 = vmatprep.subr.mxu0 0.0
  %803 = vmatpush1.msra.mxu0 0.0
  %804 = vmatprep.subr.mxu0 0.0
  %805 = vmatpush1.msra.mxu0 0.0
  %806 = vmatprep.subr.mxu0 0.0
  %807 = vmatpush1.msra.mxu0 0.0
  %808 = vmatprep.subr.mxu0 0.0
  %809 = vmatpush1.msra.mxu0 0.0
  %810 = vmatprep.subr.mxu0 0.0
  %811 = vmatpush1.msra.mxu0 0.0
  %812 = vmatprep.subr.mxu0 0.0
  %813 = vmatpush1.msra.mxu0 0.0
  %814 = vmatprep.subr.mxu0 0.0
  %815 = vmatpush1.msra.mxu0 0.0
  %816 = vmatprep.subr.mxu0 0.0
  %817 = vmatpush1.msra.mxu0 0.0
  %818 = vmatprep.subr.mxu0 0.0
  %819 = vmatpush1.msra.mxu0 0.0
  %820 = vmatprep.subr.mxu0 0.0
  %821 = vmatpush1.msra.mxu0 0.0
  %822 = vmatprep.subr.mxu0 0.0
  %823 = vmatpush1.msra.mxu0 0.0
  %824 = vmatprep.subr.mxu0 0.0
  %825 = vmatpush1.msra.mxu0 0.0
  %826 = vmatprep.subr.mxu0 0.0
  %827 = vmatpush1.msra.mxu0 0.0
  %828 = vmatprep.subr.mxu0 0.0
  %829 = vmatpush1.msra.mxu0 0.0
  %830 = vmatprep.subr.mxu0 0.0
  %831 = vmatpush1.msra.mxu0 0.0
  %832 = vmatprep.subr.mxu0 0.0
  %833 = vmatpush1.msra.mxu0 0.0
  %834 = vmatprep.subr.mxu0 0.0
  %835 = vmatpush1.msra.mxu0 0.0
  %836 = vmatprep.subr.mxu0 0.0
  %837 = vmatpush1.msra.mxu0 0.0
  %838 = vmatprep.subr.mxu0 0.0
  %839 = vmatpush1.msra.mxu0 0.0
  %840 = vmatprep.subr.mxu0 0.0
  %841 = vmatpush1.msra.mxu0 0.0
  %842 = vmatprep.subr.mxu0 0.0
  %843 = vmatpush1.msra.mxu0 0.0
  %844 = vmatprep.subr.mxu0 0.0
  %845 = vmatpush1.msra.mxu0 0.0
  %846 = vmatprep.subr.mxu0 0.0
  %847 = vmatpush1.msra.mxu0 0.0
  %848 = vmatprep.subr.mxu0 0.0
  %849 = vmatpush1.msra.mxu0 0.0
  %850 = vmatprep.mubr.f32.mxu0 0.0
  %851 = vmatmul.mubr.f32.gmra.mrb[0].mxu0 %v784
  %v852 = vpop.f32.mrb[0].mxu0
  %v853 = vadd.f32 0.0, %v852
  %v854 = vpop.f32.mrb[0].mxu0
  %855 = vdwg.mxu0
  %v857 = vsel %vm86, %v780, 0
  %859 = vmatprep.subr.mxu0 0.0
  %860 = vmatpush1.msra.mxu0 %v427
  %861 = vmatprep.subr.mxu0 0.0
  %862 = vmatpush1.msra.mxu0 %v428
  %863 = vmatprep.subr.mxu0 0.0
  %864 = vmatpush1.msra.mxu0 %v429
  %865 = vmatprep.subr.mxu0 0.0
  %866 = vmatpush1.msra.mxu0 %v430
  %867 = vmatprep.subr.mxu0 0.0
  %868 = vmatpush1.msra.mxu0 0.0
  %869 = vmatprep.subr.mxu0 0.0
  %870 = vmatpush1.msra.mxu0 0.0
  %871 = vmatprep.subr.mxu0 0.0
  %872 = vmatpush1.msra.mxu0 0.0
  %873 = vmatprep.subr.mxu0 0.0
  %874 = vmatpush1.msra.mxu0 0.0
  %875 = vmatprep.subr.mxu0 0.0
  %876 = vmatpush1.msra.mxu0 0.0
  %877 = vmatprep.subr.mxu0 0.0
  %878 = vmatpush1.msra.mxu0 0.0
  %879 = vmatprep.subr.mxu0 0.0
  %880 = vmatpush1.msra.mxu0 0.0
  %881 = vmatprep.subr.mxu0 0.0
  %882 = vmatpush1.msra.mxu0 0.0
  %883 = vmatprep.subr.mxu0 0.0
  %884 = vmatpush1.msra.mxu0 0.0
  %885 = vmatprep.subr.mxu0 0.0
  %886 = vmatpush1.msra.mxu0 0.0
  %887 = vmatprep.subr.mxu0 0.0
  %888 = vmatpush1.msra.mxu0 0.0
  %889 = vmatprep.subr.mxu0 0.0
  %890 = vmatpush1.msra.mxu0 0.0
  %891 = vmatprep.subr.mxu0 0.0
  %892 = vmatpush1.msra.mxu0 0.0
  %893 = vmatprep.subr.mxu0 0.0
  %894 = vmatpush1.msra.mxu0 0.0
  %895 = vmatprep.subr.mxu0 0.0
  %896 = vmatpush1.msra.mxu0 0.0
  %897 = vmatprep.subr.mxu0 0.0
  %898 = vmatpush1.msra.mxu0 0.0
  %899 = vmatprep.subr.mxu0 0.0
  %900 = vmatpush1.msra.mxu0 0.0
  %901 = vmatprep.subr.mxu0 0.0
  %902 = vmatpush1.msra.mxu0 0.0
  %903 = vmatprep.subr.mxu0 0.0
  %904 = vmatpush1.msra.mxu0 0.0
  %905 = vmatprep.subr.mxu0 0.0
  %906 = vmatpush1.msra.mxu0 0.0
  %907 = vmatprep.subr.mxu0 0.0
  %908 = vmatpush1.msra.mxu0 0.0
  %909 = vmatprep.subr.mxu0 0.0
  %910 = vmatpush1.msra.mxu0 0.0
  %911 = vmatprep.subr.mxu0 0.0
  %912 = vmatpush1.msra.mxu0 0.0
  %913 = vmatprep.subr.mxu0 0.0
  %914 = vmatpush1.msra.mxu0 0.0
  %915 = vmatprep.subr.mxu0 0.0
  %916 = vmatpush1.msra.mxu0 0.0
  %917 = vmatprep.subr.mxu0 0.0
  %918 = vmatpush1.msra.mxu0 0.0
  %919 = vmatprep.subr.mxu0 0.0
  %920 = vmatpush1.msra.mxu0 0.0
  %921 = vmatprep.subr.mxu0 0.0
  %922 = vmatpush1.msra.mxu0 0.0
  %923 = vmatprep.mubr.f32.mxu0 0.0
  %924 = vmatmul.mubr.f32.gmra.mrb[0].mxu0 %v857
  %v925 = vpop.f32.mrb[0].mxu0
  %v926 = vadd.f32 %v853, %v925
  %v927 = vpop.f32.mrb[0].mxu0
  %928 = vdwg.mxu0
  %s929 = scalar_lea.vmem %s7, 16
  %v930 = vld [vmem:[%s929] sm:$0xff]
  %v932 = vsel %vm86, %v930, 0
  %934 = vmatprep.subr.mxu0 0.0
  %935 = vmatpush1.msra.mxu0 %v439
  %936 = vmatprep.subr.mxu0 0.0
  %937 = vmatpush1.msra.mxu0 %v440
  %938 = vmatprep.subr.mxu0 0.0
  %939 = vmatpush1.msra.mxu0 %v441
  %940 = vmatprep.subr.mxu0 0.0
  %941 = vmatpush1.msra.mxu0 %v442
  %942 = vmatprep.subr.mxu0 0.0
  %943 = vmatpush1.msra.mxu0 0.0
  %944 = vmatprep.subr.mxu0 0.0
  %945 = vmatpush1.msra.mxu0 0.0
  %946 = vmatprep.subr.mxu0 0.0
  %947 = vmatpush1.msra.mxu0 0.0
  %948 = vmatprep.subr.mxu0 0.0
  %949 = vmatpush1.msra.mxu0 0.0
  %950 = vmatprep.subr.mxu0 0.0
  %951 = vmatpush1.msra.mxu0 0.0
  %952 = vmatprep.subr.mxu0 0.0
  %953 = vmatpush1.msra.mxu0 0.0
  %954 = vmatprep.subr.mxu0 0.0
  %955 = vmatpush1.msra.mxu0 0.0
  %956 = vmatprep.subr.mxu0 0.0
  %957 = vmatpush1.msra.mxu0 0.0
  %958 = vmatprep.subr.mxu0 0.0
  %959 = vmatpush1.msra.mxu0 0.0
  %960 = vmatprep.subr.mxu0 0.0
  %961 = vmatpush1.msra.mxu0 0.0
  %962 = vmatprep.subr.mxu0 0.0
  %963 = vmatpush1.msra.mxu0 0.0
  %964 = vmatprep.subr.mxu0 0.0
  %965 = vmatpush1.msra.mxu0 0.0
  %966 = vmatprep.subr.mxu0 0.0
  %967 = vmatpush1.msra.mxu0 0.0
  %968 = vmatprep.subr.mxu0 0.0
  %969 = vmatpush1.msra.mxu0 0.0
  %970 = vmatprep.subr.mxu0 0.0
  %971 = vmatpush1.msra.mxu0 0.0
  %972 = vmatprep.subr.mxu0 0.0
  %973 = vmatpush1.msra.mxu0 0.0
  %974 = vmatprep.subr.mxu0 0.0
  %975 = vmatpush1.msra.mxu0 0.0
  %976 = vmatprep.subr.mxu0 0.0
  %977 = vmatpush1.msra.mxu0 0.0
  %978 = vmatprep.subr.mxu0 0.0
  %979 = vmatpush1.msra.mxu0 0.0
  %980 = vmatprep.subr.mxu0 0.0
  %981 = vmatpush1.msra.mxu0 0.0
  %982 = vmatprep.subr.mxu0 0.0
  %983 = vmatpush1.msra.mxu0 0.0
  %984 = vmatprep.subr.mxu0 0.0
  %985 = vmatpush1.msra.mxu0 0.0
  %986 = vmatprep.subr.mxu0 0.0
  %987 = vmatpush1.msra.mxu0 0.0
  %988 = vmatprep.subr.mxu0 0.0
  %989 = vmatpush1.msra.mxu0 0.0
  %990 = vmatprep.subr.mxu0 0.0
  %991 = vmatpush1.msra.mxu0 0.0
  %992 = vmatprep.subr.mxu0 0.0
  %993 = vmatpush1.msra.mxu0 0.0
  %994 = vmatprep.subr.mxu0 0.0
  %995 = vmatpush1.msra.mxu0 0.0
  %996 = vmatprep.subr.mxu0 0.0
  %997 = vmatpush1.msra.mxu0 0.0
  %998 = vmatprep.mubr.f32.mxu0 0.0
  %999 = vmatmul.mubr.f32.gmra.mrb[0].mxu0 %v932
  %v1000 = vpop.f32.mrb[0].mxu0
  %v1001 = vadd.f32 0.0, %v1000
  %v1002 = vpop.f32.mrb[0].mxu0
  %1003 = vdwg.mxu0
  %v1004 = vadd.f32 %v926, %v1001
  %v1005 = vld [vmem:[%s8] sm:$0xff]
  %1007 = vset.pattern.permute.xlu0 0
  %1008 = vperm.xlu0 %1007, %v1005
  %v1009 = vpop.permute.xlu0 %1008
  %v1011 = vadd.f32 %v1004, %v1009
  %v1012 = vmax.f32 %v1011, 0.0
  %v1013 = vld [vmem:[%s9] sm:$0xff]
  %v1014 = vld [vmem:[%s9 + $0x8] sm:$0xff]
  %v1015 = vld [vmem:[%s9 + $0x10] sm:$0xff]
  %v1016 = vld [vmem:[%s9 + $0x18] sm:$0xff]
  %v1017 = vld [vmem:[%s9 + $0x20] sm:$0xff]
  %v1018 = vld [vmem:[%s9 + $0x28] sm:$0xff]
  %v1019 = vld [vmem:[%s9 + $0x30] sm:$0xff]
  %v1020 = vld [vmem:[%s9 + $0x38] sm:$0xff]
  %vm1021 = vcmask 64512
  %v1023 = vsel %vm1021, %v1013, 0
  %v1026 = vsel %vm1021, %v1014, 0
  %v1029 = vsel %vm1021, %v1015, 0
  %v1032 = vsel %vm1021, %v1016, 0
  %v1035 = vsel %vm1021, %v1017, 0
  %v1038 = vsel %vm1021, %v1018, 0
  %v1041 = vsel %vm1021, %v1019, 0
  %v1044 = vsel %vm1021, %v1020, 0
  %1046 = vmatprep.subr.mxu0 0.0
  %1047 = vmatpush1.msra.mxu0 %v1012
  %1048 = vmatprep.subr.mxu0 0.0
  %1049 = vmatpush1.msra.mxu0 0.0
  %1050 = vmatprep.subr.mxu0 0.0
  %1051 = vmatpush1.msra.mxu0 0.0
  %1052 = vmatprep.subr.mxu0 0.0
  %1053 = vmatpush1.msra.mxu0 0.0
  %1054 = vmatprep.subr.mxu0 0.0
  %1055 = vmatpush1.msra.mxu0 0.0
  %1056 = vmatprep.subr.mxu0 0.0
  %1057 = vmatpush1.msra.mxu0 0.0
  %1058 = vmatprep.subr.mxu0 0.0
  %1059 = vmatpush1.msra.mxu0 0.0
  %1060 = vmatprep.subr.mxu0 0.0
  %1061 = vmatpush1.msra.mxu0 0.0
  %1062 = vmatprep.subr.mxu0 0.0
  %1063 = vmatpush1.msra.mxu0 0.0
  %1064 = vmatprep.subr.mxu0 0.0
  %1065 = vmatpush1.msra.mxu0 0.0
  %1066 = vmatprep.subr.mxu0 0.0
  %1067 = vmatpush1.msra.mxu0 0.0
  %1068 = vmatprep.subr.mxu0 0.0
  %1069 = vmatpush1.msra.mxu0 0.0
  %1070 = vmatprep.subr.mxu0 0.0
  %1071 = vmatpush1.msra.mxu0 0.0
  %1072 = vmatprep.subr.mxu0 0.0
  %1073 = vmatpush1.msra.mxu0 0.0
  %1074 = vmatprep.subr.mxu0 0.0
  %1075 = vmatpush1.msra.mxu0 0.0
  %1076 = vmatprep.subr.mxu0 0.0
  %1077 = vmatpush1.msra.mxu0 0.0
  %1078 = vmatprep.subr.mxu0 0.0
  %1079 = vmatpush1.msra.mxu0 0.0
  %1080 = vmatprep.subr.mxu0 0.0
  %1081 = vmatpush1.msra.mxu0 0.0
  %1082 = vmatprep.subr.mxu0 0.0
  %1083 = vmatpush1.msra.mxu0 0.0
  %1084 = vmatprep.subr.mxu0 0.0
  %1085 = vmatpush1.msra.mxu0 0.0
  %1086 = vmatprep.subr.mxu0 0.0
  %1087 = vmatpush1.msra.mxu0 0.0
  %1088 = vmatprep.subr.mxu0 0.0
  %1089 = vmatpush1.msra.mxu0 0.0
  %1090 = vmatprep.subr.mxu0 0.0
  %1091 = vmatpush1.msra.mxu0 0.0
  %1092 = vmatprep.subr.mxu0 0.0
  %1093 = vmatpush1.msra.mxu0 0.0
  %1094 = vmatprep.subr.mxu0 0.0
  %1095 = vmatpush1.msra.mxu0 0.0
  %1096 = vmatprep.subr.mxu0 0.0
  %1097 = vmatpush1.msra.mxu0 0.0
  %1098 = vmatprep.subr.mxu0 0.0
  %1099 = vmatpush1.msra.mxu0 0.0
  %1100 = vmatprep.subr.mxu0 0.0
  %1101 = vmatpush1.msra.mxu0 0.0
  %1102 = vmatprep.subr.mxu0 0.0
  %1103 = vmatpush1.msra.mxu0 0.0
  %1104 = vmatprep.subr.mxu0 0.0
  %1105 = vmatpush1.msra.mxu0 0.0
  %1106 = vmatprep.subr.mxu0 0.0
  %1107 = vmatpush1.msra.mxu0 0.0
  %1108 = vmatprep.subr.mxu0 0.0
  %1109 = vmatpush1.msra.mxu0 0.0
  %1110 = vmatprep.mubr.f32.mxu0 0.0
  %1111 = vmatmul.mubr.f32.gmra.mrb[0].mxu0 %v1023
  %v1112 = vpop.f32.mrb[0].mxu0
  %v1113 = vadd.f32 0.0, %v1112
  %v1114 = vpop.f32.mrb[0].mxu0
  %1115 = vmatprep.mubr.f32.mxu0 0.0
  %1116 = vmatmul.mubr.f32.gmra.mrb[0].mxu0 %v1026
  %v1117 = vpop.f32.mrb[0].mxu0
  %v1118 = vadd.f32 0.0, %v1117
  %v1119 = vpop.f32.mrb[0].mxu0
  %1120 = vmatprep.mubr.f32.mxu0 0.0
  %1121 = vmatmul.mubr.f32.gmra.mrb[0].mxu0 %v1029
  %v1122 = vpop.f32.mrb[0].mxu0
  %v1123 = vadd.f32 0.0, %v1122
  %v1124 = vpop.f32.mrb[0].mxu0
  %1125 = vmatprep.mubr.f32.mxu0 0.0
  %1126 = vmatmul.mubr.f32.gmra.mrb[0].mxu0 %v1032
  %v1127 = vpop.f32.mrb[0].mxu0
  %v1128 = vadd.f32 0.0, %v1127
  %v1129 = vpop.f32.mrb[0].mxu0
  %1130 = vmatprep.mubr.f32.mxu0 0.0
  %1131 = vmatmul.mubr.f32.gmra.mrb[0].mxu0 %v1035
  %v1132 = vpop.f32.mrb[0].mxu0
  %v1133 = vadd.f32 0.0, %v1132
  %v1134 = vpop.f32.mrb[0].mxu0
  %1135 = vmatprep.mubr.f32.mxu0 0.0
  %1136 = vmatmul.mubr.f32.gmra.mrb[0].mxu0 %v1038
  %v1137 = vpop.f32.mrb[0].mxu0
  %v1138 = vadd.f32 0.0, %v1137
  %v1139 = vpop.f32.mrb[0].mxu0
  %1140 = vmatprep.mubr.f32.mxu0 0.0
  %1141 = vmatmul.mubr.f32.gmra.mrb[0].mxu0 %v1041
  %v1142 = vpop.f32.mrb[0].mxu0
  %v1143 = vadd.f32 0.0, %v1142
  %v1144 = vpop.f32.mrb[0].mxu0
  %1145 = vmatprep.mubr.f32.mxu0 0.0
  %1146 = vmatmul.mubr.f32.gmra.mrb[0].mxu0 %v1044
  %v1147 = vpop.f32.mrb[0].mxu0
  %v1148 = vadd.f32 0.0, %v1147
  %v1149 = vpop.f32.mrb[0].mxu0
  %1150 = vdwg.mxu0
  %v1151 = vxor.u32 %v1113, 2147483648
  %v1152 = vxor.u32 %v1118, 2147483648
  %v1153 = vxor.u32 %v1123, 2147483648
  %v1154 = vxor.u32 %v1128, 2147483648
  %v1155 = vmul.f32 %v1151, 1.442695
  %v1156 = vpow.pop %v1155
  %v1157 = vmul.f32 %v1152, 1.442695
  %v1158 = vpow.pop %v1157
  %v1159 = vmul.f32 %v1153, 1.442695
  %v1160 = vpow.pop %v1159
  %v1161 = vmul.f32 %v1154, 1.442695
  %v1162 = vpow.pop %v1161
  %v1163 = vadd.f32 %v1156, 1.0
  %v1164 = vadd.f32 %v1158, 1.0
  %v1165 = vadd.f32 %v1160, 1.0
  %v1166 = vadd.f32 %v1162, 1.0
  %v1167 = vrcp.pop %v1163
  %v1168 = vmul.f32 1.0, %v1167
  %v1169 = vrcp.pop %v1164
  %v1170 = vmul.f32 1.0, %v1169
  %v1171 = vrcp.pop %v1165
  %v1172 = vmul.f32 1.0, %v1171
  %v1173 = vrcp.pop %v1166
  %v1174 = vmul.f32 1.0, %v1173
  %v1175 = vmul.f32 %v776, %v1168
  %v1176 = vmul.f32 %v777, %v1170
  %v1177 = vmul.f32 %v778, %v1172
  %v1178 = vmul.f32 %v779, %v1174
  %v1179 = vadd.f32 %v35, %v1175
  %v1180 = vadd.f32 %v36, %v1176
  %v1181 = vadd.f32 %v37, %v1177
  %v1182 = vadd.f32 %v38, %v1178
  %v1183 = vadd.f32 %v1179, %v1133
  %v1184 = vadd.f32 %v1180, %v1138
  %v1185 = vadd.f32 %v1181, %v1143
  %v1186 = vadd.f32 %v1182, %v1148
  %v1187 = vmax.f32 %v1183, 0.0
  %v1188 = vmax.f32 %v1184, 0.0
  %v1189 = vmax.f32 %v1185, 0.0
  %v1190 = vmax.f32 %v1186, 0.0
  %1191 = vst [vmem:[%s10] sm:$0xff] %v1187
  %1192 = vst [vmem:[%s10 + $0x8] sm:$0xff] %v1188
  %1193 = vst [vmem:[%s10 + $0x10] sm:$0xff] %v1189
  %1194 = vst [vmem:[%s10 + $0x18] sm:$0xff] %v1190
  // Predicated region
  $region42: #{resblock_forward.1} parent=0 // pred_check
    _
  $region43: #{resblock_forward.1} parent=0 // pred_check_branch
    %1196 = sbr.rel (0) target = $region45
  $region44: #{resblock_forward.1} parent=0 // pred_region
    _
  $region45: #{resblock_forward.1} parent=0 // pred_fallthru
    _
  // Predicated region
  $region46: #{resblock_forward.1} parent=0 // pred_check
    _
  $region47: #{resblock_forward.1} parent=0 // pred_check_branch
    %1198 = sbr.rel (0) target = $region49
  $region48: #{resblock_forward.1} parent=0 // pred_region
    _
  $region49: #{resblock_forward.1} parent=0 // pred_fallthru
    _

</llo_original>
